<compile_context>
chip_gen: v6e
topology: v6e:2x2x1
jax: 0.10.0
libtpu: 0.0.40
codegen_flags: <defaults>
</compile_context>

<pallas_src>
import functools

import jax
import jax.numpy as jnp
from jax.experimental import pallas as pl
from jax.experimental.pallas import tpu as pltpu


def _round_up(x, m):
    return ((x + m - 1) // m) * m


def _actor_kernel(x_ref, w_ref, b_ref, o_ref, *, s, s_pad, h, mxu_dtype):
    # x_ref: (tile, s) input dtype     w_ref: (s_pad + 2h, h) mxu_dtype
    # b_ref: (8, h) f32 (rows 0..2)    o_ref: (tile, h) f32 or bf16 (lane-dense)
    x = x_ref[...].astype(mxu_dtype)          # VPU cast is free (mem-bound kernel)
    w1 = w_ref[0:s, :]                        # packed-row 0..S-1 is W1
    w2 = w_ref[s_pad:s_pad + h, :]
    w3 = w_ref[s_pad + h:s_pad + 2 * h, :]

    # layer 1: Linear(S -> H) + ReLU   (MXU matmul, f32 accumulate, f32 VPU ops)
    h1 = jnp.dot(x, w1, preferred_element_type=jnp.float32) + b_ref[0:1, :]
    h1 = jnp.maximum(h1, 0.0)
    # layer 2: Linear(H -> H) + ReLU
    h2 = jnp.dot(h1.astype(mxu_dtype), w2, preferred_element_type=jnp.float32) + b_ref[1:2, :]
    h2 = jnp.maximum(h2, 0.0)
    # output layer: Linear(H -> A), written into a 128-wide (lane-dense) slab
    out = jnp.dot(h2.astype(mxu_dtype), w3, preferred_element_type=jnp.float32) + b_ref[2:3, :]
    o_ref[...] = out.astype(o_ref.dtype)


def pack_actor_params(params, *, mxu_dtype=jnp.bfloat16):
    """Pack weights/biases once so repeated calls reuse 2 small resident buffers."""
    w1, b1, w2, b2, w3, b3 = (params[k] for k in ("w1", "b1", "w2", "b2", "w3", "b3"))
    S, H = w1.shape
    A = w3.shape[1]
    assert w2.shape == (H, H) and w3.shape[0] == H, "expects hidden_sizes=(H, H)"
    assert H % 128 == 0, "hidden size must be a multiple of 128"
    assert A <= H

    s_pad = _round_up(S, 16)  # keeps W2/W3 rows sublane-aligned for f32 (8) and bf16 (16)
    w1p = jnp.pad(w1, ((0, s_pad - S), (0, 0)))
    w3p = jnp.pad(w3, ((0, 0), (0, H - A)))
    w_packed = jnp.concatenate([w1p, w2, w3p], axis=0).astype(mxu_dtype)

    b = jnp.stack(
        [b1.reshape(-1), b2.reshape(-1), jnp.pad(b3.reshape(-1), (0, H - A))], axis=0
    ).astype(jnp.float32)
    b_packed = jnp.pad(b, ((0, 8 - 3), (0, 0)))  # (8, H)

    meta = dict(state_dim=S, s_pad=s_pad, hidden=H, action_dim=A, mxu_dtype=mxu_dtype)
    return {"w": w_packed, "b": b_packed, "meta": meta}


def actor_apply(state, packed, *, tile_b=1024):
    """state: (B, state_dim); packed: output of pack_actor_params."""
    meta = packed["meta"]
    S, s_pad, H, A = meta["state_dim"], meta["s_pad"], meta["hidden"], meta["action_dim"]
    mxu_dtype = meta["mxu_dtype"]
    w_packed, b_packed = packed["w"], packed["b"]
    B = state.shape[0]
    assert state.shape[1] == S

    exact = jnp.result_type(mxu_dtype) == jnp.float32
    out_dtype = jnp.float32 if exact else jnp.bfloat16   # bf16 writeback on fast path
    out_itemsize = 4 if exact else 2

    if B <= tile_b:
        # Small-batch fast path: single block, no row padding/alignment needed
        # (block dims equal to the full array dims are always legal).
        tile = B
    else:
        # Large batches: big row tiles amortize per-step overhead; B > tile_b
        # guarantees >= 2 "parallel" grid steps, so v7x megacore shards rows.
        tile = _round_up(tile_b, 8)
    grid = pl.cdiv(B, tile)

    kernel = functools.partial(_actor_kernel, s=S, s_pad=s_pad, h=H, mxu_dtype=mxu_dtype)

    flops = 2 * B * (S * H + 2 * H * H)
    bytes_accessed = (
        B * S * state.dtype.itemsize
        + B * H * out_itemsize
        + int(w_packed.size) * w_packed.dtype.itemsize
        + int(b_packed.size) * 4
    )

    out = pl.pallas_call(
        kernel,
        out_shape=jax.ShapeDtypeStruct((B, H), out_dtype),
        grid_spec=pltpu.PrefetchScalarGridSpec(
            num_scalar_prefetch=0,
            grid=(grid,),
            in_specs=[
                pl.BlockSpec((tile, S), lambda i: (i, 0)),       # batched activations
                pl.BlockSpec(w_packed.shape, lambda i: (0, 0)),  # weights: DMA'd once, resident
                pl.BlockSpec(b_packed.shape, lambda i: (0, 0)),  # biases: DMA'd once, resident
            ],
            out_specs=pl.BlockSpec((tile, H), lambda i: (i, 0)),  # lane-dense 128-wide store
        ),
        compiler_params=pltpu.CompilerParams(dimension_semantics=("parallel",)),
        cost_estimate=pl.CostEstimate(
            flops=flops, transcendentals=0, bytes_accessed=bytes_accessed
        ),
    )(state, w_packed, b_packed)

    return out[:, :A].astype(state.dtype)


def actor_forward(state, params, *, mxu_dtype=jnp.bfloat16, tile_b=1024):
    """One-shot convenience wrapper (packs weights + applies)."""
    return actor_apply(state, pack_actor_params(params, mxu_dtype=mxu_dtype), tile_b=tile_b)


def init_actor_params(key, state_dim, action_dim, hidden_sizes=(128, 128)):
    """Deterministic init mimicking PyTorch nn.Linear default (U[-1/sqrt(fan_in), +])."""
    dims = [state_dim, *hidden_sizes, action_dim]
    params = {}
    for i, name in enumerate(["1", "2", "3"]):
        fan_in, fan_out = dims[i], dims[i + 1]
        key, kw, kb = jax.random.split(key, 3)
        bound = 1.0 / jnp.sqrt(jnp.float32(fan_in))
        params[f"w{name}"] = jax.random.uniform(kw, (fan_in, fan_out), jnp.float32, -bound, bound)
        params[f"b{name}"] = jax.random.uniform(kb, (1, fan_out), jnp.float32, -bound, bound)
    return params


def actor_reference(state, params):
    h1 = jnp.maximum(state @ params["w1"] + params["b1"], 0.0)
    h2 = jnp.maximum(h1 @ params["w2"] + params["b2"], 0.0)
    return h2 @ params["w3"] + params["b3"]


if __name__ == "__main__":
    STATE_DIM, ACTION_DIM = 32, 8
    key = jax.random.PRNGKey(0)
    key, ks1, ks2 = jax.random.split(key, 3)
    params = init_actor_params(key, STATE_DIM, ACTION_DIM, hidden_sizes=(128, 128))

    # 1) exact-semantics path (f32 MXU inputs, f32 writeback), small single-block
    #    fast path -> tight tolerance against the pure-JAX reference.
    packed_f32 = pack_actor_params(params, mxu_dtype=jnp.float32)
    state_small = jax.random.normal(ks1, (8, STATE_DIM), jnp.float32)
    out = jax.block_until_ready(actor_apply(state_small, packed_f32))
    ref = actor_reference(state_small, params)
    assert out.shape == (8, ACTION_DIM), out.shape
    assert jnp.allclose(out, ref, atol=1e-4, rtol=1e-4), float(jnp.max(jnp.abs(out - ref)))

    # 2) fast path: bf16 MXU inputs + bf16 writeback, odd batch with a tiny tile
    #    to exercise a multi-step parallel grid, a partial final block (no row
    #    padding anywhere), and resident packed weights reused across steps.
    packed_bf16 = pack_actor_params(params, mxu_dtype=jnp.bfloat16)
    state_batched = jax.random.normal(ks2, (50, STATE_DIM), jnp.float32)
    out_b = jax.block_until_ready(actor_apply(state_batched, packed_bf16, tile_b=16))
    ref_b = actor_reference(state_batched, params)
    assert out_b.shape == (50, ACTION_DIM), out_b.shape
    # bf16 MXU inputs + bf16 store (f32 accumulate): expect ~1e-2 abs error vs f32 ref.
    assert jnp.allclose(out_b, ref_b, atol=1e-1, rtol=1e-1), float(jnp.max(jnp.abs(out_b - ref_b)))

    print("KERNEL_OK")
</pallas_src>

<mosaic_0001>
module attributes {stable_mosaic.version = 11 : i64} {
  func.func @_actor_kernel(%arg0: i32, %arg1: memref<8x32xf32, #tpu.memory_space<vmem>>, %arg2: memref<288x128xf32, #tpu.memory_space<vmem>>, %arg3: memref<8x128xf32, #tpu.memory_space<vmem>>, %arg4: memref<8x128xf32, #tpu.memory_space<vmem>>) attributes {dimension_semantics = [#tpu.dimension_semantics<parallel>], iteration_bounds = array<i64: 1>, scalar_prefetch = 0 : i64, scratch_operands = 0 : i64, tpu.core_type = #tpu.core_type<tc>, window_params = [{transform_indices = @transform_0, window_bounds = array<i64: 8, 32>}, {pipeline_mode = #tpu.pipeline_mode<synchronous>, transform_indices = @transform_1, window_bounds = array<i64: 288, 128>}, {pipeline_mode = #tpu.pipeline_mode<synchronous>, transform_indices = @transform_2, window_bounds = array<i64: 8, 128>}, {transform_indices = @transform_3, window_bounds = array<i64: 8, 128>}]} {
    %c0 = arith.constant 0 : index
    %c0_0 = arith.constant 0 : index
    %0 = vector.load %arg1[%c0, %c0_0] : memref<8x32xf32, #tpu.memory_space<vmem>>, vector<8x32xf32>
    %c0_1 = arith.constant 0 : index
    %c0_2 = arith.constant 0 : index
    %1 = vector.load %arg2[%c0_1, %c0_2] : memref<288x128xf32, #tpu.memory_space<vmem>>, vector<32x128xf32>
    %c32 = arith.constant 32 : index
    %c0_3 = arith.constant 0 : index
    %2 = vector.load %arg2[%c32, %c0_3] : memref<288x128xf32, #tpu.memory_space<vmem>>, vector<128x128xf32>
    %c160 = arith.constant 160 : index
    %c0_4 = arith.constant 0 : index
    %3 = vector.load %arg2[%c160, %c0_4] : memref<288x128xf32, #tpu.memory_space<vmem>>, vector<128x128xf32>
    %cst = arith.constant dense<0.000000e+00> : vector<8x128xf32>
    %4 = tpu.matmul %0, %1, %cst {dimension_numbers = #tpu.dot_dimension_numbers<[1], [0], [0], [1], [0, 0, 1, 1], [], []>} : vector<8x32xf32>, vector<32x128xf32>, vector<8x128xf32> -> vector<8x128xf32>
    %c0_5 = arith.constant 0 : index
    %c0_6 = arith.constant 0 : index
    %5 = vector.load %arg3[%c0_5, %c0_6] : memref<8x128xf32, #tpu.memory_space<vmem>>, vector<1x128xf32>
    %6 = vector.broadcast %5 : vector<1x128xf32> to vector<8x128xf32>
    %7 = arith.addf %4, %6 : vector<8x128xf32>
    %cst_7 = arith.constant 0.000000e+00 : f32
    %8 = vector.broadcast %cst_7 : f32 to vector<8x128xf32>
    %9 = arith.maximumf %7, %8 : vector<8x128xf32>
    %cst_8 = arith.constant dense<0.000000e+00> : vector<8x128xf32>
    %10 = tpu.matmul %9, %2, %cst_8 {dimension_numbers = #tpu.dot_dimension_numbers<[1], [0], [0], [1], [0, 0, 1, 1], [], []>} : vector<8x128xf32>, vector<128x128xf32>, vector<8x128xf32> -> vector<8x128xf32>
    %c1 = arith.constant 1 : index
    %c0_9 = arith.constant 0 : index
    %11 = vector.load %arg3[%c1, %c0_9] : memref<8x128xf32, #tpu.memory_space<vmem>>, vector<1x128xf32>
    %12 = vector.broadcast %11 : vector<1x128xf32> to vector<8x128xf32>
    %13 = arith.addf %10, %12 : vector<8x128xf32>
    %cst_10 = arith.constant 0.000000e+00 : f32
    %14 = vector.broadcast %cst_10 : f32 to vector<8x128xf32>
    %15 = arith.maximumf %13, %14 : vector<8x128xf32>
    %cst_11 = arith.constant dense<0.000000e+00> : vector<8x128xf32>
    %16 = tpu.matmul %15, %3, %cst_11 {dimension_numbers = #tpu.dot_dimension_numbers<[1], [0], [0], [1], [0, 0, 1, 1], [], []>} : vector<8x128xf32>, vector<128x128xf32>, vector<8x128xf32> -> vector<8x128xf32>
    %c2 = arith.constant 2 : index
    %c0_12 = arith.constant 0 : index
    %17 = vector.load %arg3[%c2, %c0_12] : memref<8x128xf32, #tpu.memory_space<vmem>>, vector<1x128xf32>
    %18 = vector.broadcast %17 : vector<1x128xf32> to vector<8x128xf32>
    %19 = arith.addf %16, %18 : vector<8x128xf32>
    %c0_13 = arith.constant 0 : index
    %c0_14 = arith.constant 0 : index
    %20 = vector.load %arg4[%c0_13, %c0_14] : memref<8x128xf32, #tpu.memory_space<vmem>>, vector<8x128xf32>
    tpu.vector_store %arg4[%c0_13, %c0_14], %19 {strides = array<i32>} : memref<8x128xf32, #tpu.memory_space<vmem>>, vector<8x128xf32>,
    return
  }
  func.func @transform_0(%arg0: i32) -> (i32, i32) {
    %c0_i32 = arith.constant 0 : i32
    %c0_i32_0 = arith.constant 0 : i32
    return %arg0, %c0_i32 : i32, i32
  }
  func.func @transform_1(%arg0: i32) -> (i32, i32) {
    %c0_i32 = arith.constant 0 : i32
    %c0_i32_0 = arith.constant 0 : i32
    %c0_i32_1 = arith.constant 0 : i32
    return %c0_i32, %c0_i32_0 : i32, i32
  }
  func.func @transform_2(%arg0: i32) -> (i32, i32) {
    %c0_i32 = arith.constant 0 : i32
    %c0_i32_0 = arith.constant 0 : i32
    %c0_i32_1 = arith.constant 0 : i32
    return %c0_i32, %c0_i32_0 : i32, i32
  }
  func.func @transform_3(%arg0: i32) -> (i32, i32) {
    %c0_i32 = arith.constant 0 : i32
    %c0_i32_0 = arith.constant 0 : i32
    return %arg0, %c0_i32 : i32, i32
  }
}

</mosaic_0001>

<llo_original>
// kernel: tpu_custom_call.1
$region0: #{tpu_custom_call.1}
  #allocation0 [shape = 'u32[]', space=smem, size = 0x4, offset = 0x4, fixed_abs, tag = 'smem constant byte address 0x4 - core index']
  #allocation1 [shape = 'u32[144,128]{1,0:T(1,128)}', space=vmem, size = 0x12000, scoped, tag = 'internal scratch']
  %s0 = inlined_call_operand.hbm [shape: f32[8,32], index: 0, kind: input, shape index: {}]
  %s1 = inlined_call_operand.hbm [shape: f32[288,128], index: 1, kind: input, shape index: {}]
  %s2 = inlined_call_operand.hbm [shape: f32[8,128], index: 2, kind: input, shape index: {}]
  %s3 = inlined_call_operand.hbm [shape: f32[8,128], index: 3, kind: output, shape index: {}]
  %s4 = sld [smem:[#allocation0]]
  $region34: #{tpu_custom_call.1} parent=0
    _
  %s6 = ssub.s32 1, %s4
  %s7 = scalar_select 0, %s6, %s4
  $region1: #{tpu_custom_call.1} parent=0
    #allocation2 [shape = 'u8[4096]{0}', space=vmem, size = 0x1000, scoped, tag = 'input window, operand 0, single buffered']
    #allocation3 [shape = 's32[1]{0}', space=sflag, size = 0x4, scoped, tag = 'scoped memory for tpu_custom_call.1']
    #allocation4 [shape = 's32[1]{0}', space=sflag, size = 0x4, scoped, tag = 'scoped memory for tpu_custom_call.1']
    #allocation5 [shape = 'u8[147456]{0}', space=vmem, size = 0x24000, scoped, tag = 'input window, operand 1, single buffered']
    #allocation6 [shape = 's32[1]{0}', space=sflag, size = 0x4, scoped, tag = 'scoped memory for tpu_custom_call.1']
    #allocation7 [shape = 'u8[4096]{0}', space=vmem, size = 0x1000, scoped, tag = 'input window, operand 2, single buffered']
    #allocation8 [shape = 'u8[4096]{0}', space=vmem, size = 0x1000, scoped, tag = 'output window, operand 0, single buffered']
    %8 = vsyncpa [#allocation3], 0
    %9 = vsyncpa [#allocation6], 0
    %10 = vsyncpa [#allocation4], 0
    // Predicated region
    $region2: #{tpu_custom_call.1} parent=1 // pred_check
      _
    $region3: #{tpu_custom_call.1} parent=1 // pred_check_branch
      %12 = sbr.rel (0) target = $region5
    $region4: #{tpu_custom_call.1} parent=1 // pred_region
      %s14 = ssub.s32 128, 128
      %15 = vsyncadd [#allocation3], %s14
      %s17 = sshll.u32 [#allocation2], 4
      %s18 = int_to_ptr.vmem [resolvable:$true] %s17
      %20 = dma.hbm_to_vmem [thread:$0]  %s0, 128, %s18, [#allocation3]
    $region5: #{tpu_custom_call.1} parent=1 // pred_fallthru
      _
    // Predicated region
    $region6: #{tpu_custom_call.1} parent=1 // pred_check
      _
    $region7: #{tpu_custom_call.1} parent=1 // pred_check_branch
      %22 = sbr.rel (0) target = $region9
    $region8: #{tpu_custom_call.1} parent=1 // pred_region
      %s24 = ssub.s32 4608, 4608
      %25 = vsyncadd [#allocation6], %s24
      %s26 = sshll.u32 [#allocation5], 4
      %s27 = int_to_ptr.vmem [resolvable:$true] %s26
      %32 = dma.hbm_to_vmem [thread:$0]  %s1, 4608, %s27, [#allocation6], 128, 128, 8
    $region9: #{tpu_custom_call.1} parent=1 // pred_fallthru
      _
    // Predicated region
    $region10: #{tpu_custom_call.1} parent=1 // pred_check
      _
    $region11: #{tpu_custom_call.1} parent=1 // pred_check_branch
      %34 = sbr.rel (0) target = $region13
    $region12: #{tpu_custom_call.1} parent=1 // pred_region
      %s36 = ssub.s32 128, 128
      %37 = vsyncadd [#allocation6], %s36
      %s39 = sshll.u32 [#allocation7], 4
      %s40 = int_to_ptr.vmem [resolvable:$true] %s39
      %42 = dma.hbm_to_vmem [thread:$0]  %s2, 128, %s40, [#allocation6]
    $region13: #{tpu_custom_call.1} parent=1 // pred_fallthru
      _
    // Predicated region
    $region14: #{tpu_custom_call.1} parent=1 // pred_check
      _
    $region15: #{tpu_custom_call.1} parent=1 // pred_check_branch
      %44 = sbr.rel (0) target = $region17
    $region16: #{tpu_custom_call.1} parent=1 // pred_region
      %45 = dma.done [#allocation3], 128
    $region17: #{tpu_custom_call.1} parent=1 // pred_fallthru
      _
    // Predicated region
    $region18: #{tpu_custom_call.1} parent=1 // pred_check
      _
    $region19: #{tpu_custom_call.1} parent=1 // pred_check_branch
      %47 = sbr.rel (0) target = $region21
    $region20: #{tpu_custom_call.1} parent=1 // pred_region
      %48 = dma.done [#allocation6], 4608
    $region21: #{tpu_custom_call.1} parent=1 // pred_fallthru
      _
    // Predicated region
    $region22: #{tpu_custom_call.1} parent=1 // pred_check
      _
    $region23: #{tpu_custom_call.1} parent=1 // pred_check_branch
      %50 = sbr.rel (0) target = $region25
    $region24: #{tpu_custom_call.1} parent=1 // pred_region
      %51 = dma.done [#allocation6], 128
    $region25: #{tpu_custom_call.1} parent=1 // pred_fallthru
      _
    %v52 = vld [vmem:[#allocation2] sm:$0xff]
    %v53 = vld [vmem:[#allocation5] sm:$0xff]
    %v54 = vld [vmem:[#allocation5 + $0x8] sm:$0xff]
    %v55 = vld [vmem:[#allocation5 + $0x10] sm:$0xff]
    %v56 = vld [vmem:[#allocation5 + $0x18] sm:$0xff]
    %v57 = vld [vmem:[#allocation5 + $0x20] sm:$0xff]
    %v58 = vld [vmem:[#allocation5 + $0x28] sm:$0xff]
    %v59 = vld [vmem:[#allocation5 + $0x30] sm:$0xff]
    %v60 = vld [vmem:[#allocation5 + $0x38] sm:$0xff]
    %v61 = vld [vmem:[#allocation5 + $0x40] sm:$0xff]
    %v62 = vld [vmem:[#allocation5 + $0x48] sm:$0xff]
    %v63 = vld [vmem:[#allocation5 + $0x50] sm:$0xff]
    %v64 = vld [vmem:[#allocation5 + $0x58] sm:$0xff]
    %v65 = vld [vmem:[#allocation5 + $0x60] sm:$0xff]
    %v66 = vld [vmem:[#allocation5 + $0x68] sm:$0xff]
    %v67 = vld [vmem:[#allocation5 + $0x70] sm:$0xff]
    %v68 = vld [vmem:[#allocation5 + $0x78] sm:$0xff]
    %v69 = vld [vmem:[#allocation5 + $0x80] sm:$0xff]
    %v70 = vld [vmem:[#allocation5 + $0x88] sm:$0xff]
    %v71 = vld [vmem:[#allocation5 + $0x90] sm:$0xff]
    %v72 = vld [vmem:[#allocation5 + $0x98] sm:$0xff]
    %v73 = vld [vmem:[#allocation5 + $0xa0] sm:$0xff]
    %v74 = vld [vmem:[#allocation5 + $0xa8] sm:$0xff]
    %v75 = vld [vmem:[#allocation5 + $0xb0] sm:$0xff]
    %v76 = vld [vmem:[#allocation5 + $0xb8] sm:$0xff]
    %v77 = vld [vmem:[#allocation5 + $0xc0] sm:$0xff]
    %v78 = vld [vmem:[#allocation5 + $0xc8] sm:$0xff]
    %v79 = vld [vmem:[#allocation5 + $0xd0] sm:$0xff]
    %v80 = vld [vmem:[#allocation5 + $0xd8] sm:$0xff]
    %v81 = vld [vmem:[#allocation5 + $0xe0] sm:$0xff]
    %v82 = vld [vmem:[#allocation5 + $0xe8] sm:$0xff]
    %v83 = vld [vmem:[#allocation5 + $0xf0] sm:$0xff]
    %v84 = vld [vmem:[#allocation5 + $0xf8] sm:$0xff]
    %v85 = vld [vmem:[#allocation5 + $0x100] sm:$0xff]
    %v86 = vld [vmem:[#allocation5 + $0x108] sm:$0xff]
    %v87 = vld [vmem:[#allocation5 + $0x110] sm:$0xff]
    %v88 = vld [vmem:[#allocation5 + $0x118] sm:$0xff]
    %v89 = vld [vmem:[#allocation7] sm:$0x1]
    %v90 = vlaneseq
    %v91 = vshrl.u32 %v90, 7
    %v92 = vsub.s32 0, %v91
    %v93 = vrot.slane %v89, %v92
    %vm94 = vcmask 261120
    %v96 = vsel %vm94, %v52, 0
    %98 = vmatprep.subr.mxu0 0.0
    %99 = vmatpush1.msra.mxu0 0.0
    %100 = vmatprep.subr.mxu0 0.0
    %101 = vmatpush1.msra.mxu0 0.0
    %102 = vmatprep.subr.mxu0 0.0
    %103 = vmatpush1.msra.mxu0 0.0
    %104 = vmatprep.subr.mxu0 0.0
    %105 = vmatpush1.msra.mxu0 0.0
    %106 = vmatprep.subr.mxu0 0.0
    %107 = vmatpush1.msra.mxu0 0.0
    %108 = vmatprep.subr.mxu0 0.0
    %109 = vmatpush1.msra.mxu0 0.0
    %110 = vmatprep.subr.mxu0 0.0
    %111 = vmatpush1.msra.mxu0 0.0
    %112 = vmatprep.subr.mxu0 0.0
    %113 = vmatpush1.msra.mxu0 0.0
    %114 = vmatprep.subr.mxu0 0.0
    %115 = vmatpush1.msra.mxu0 0.0
    %116 = vmatprep.subr.mxu0 0.0
    %117 = vmatpush1.msra.mxu0 0.0
    %118 = vmatprep.subr.mxu0 0.0
    %119 = vmatpush1.msra.mxu0 0.0
    %120 = vmatprep.subr.mxu0 0.0
    %121 = vmatpush1.msra.mxu0 0.0
    %122 = vmatprep.subr.mxu0 0.0
    %123 = vmatpush1.msra.mxu0 %v56
    %124 = vmatprep.subr.mxu0 0.0
    %125 = vmatpush1.msra.mxu0 %v55
    %126 = vmatprep.subr.mxu0 0.0
    %127 = vmatpush1.msra.mxu0 %v54
    %128 = vmatprep.subr.mxu0 0.0
    %129 = vmatpush1.msra.mxu0 %v53
    %130 = vmatprep.subr.mxu0 0.0
    %131 = vmatpush2.msra.mxu0 0.0
    %132 = vmatprep.subr.mxu0 0.0
    %133 = vmatpush2.msra.mxu0 0.0
    %134 = vmatprep.subr.mxu0 0.0
    %135 = vmatpush2.msra.mxu0 0.0
    %136 = vmatprep.subr.mxu0 0.0
    %137 = vmatpush2.msra.mxu0 0.0
    %138 = vmatprep.subr.mxu0 0.0
    %139 = vmatpush2.msra.mxu0 0.0
    %140 = vmatprep.subr.mxu0 0.0
    %141 = vmatpush2.msra.mxu0 0.0
    %142 = vmatprep.subr.mxu0 0.0
    %143 = vmatpush2.msra.mxu0 0.0
    %144 = vmatprep.subr.mxu0 0.0
    %145 = vmatpush2.msra.mxu0 0.0
    %146 = vmatprep.subr.mxu0 0.0
    %147 = vmatpush2.msra.mxu0 0.0
    %148 = vmatprep.subr.mxu0 0.0
    %149 = vmatpush2.msra.mxu0 0.0
    %150 = vmatprep.subr.mxu0 0.0
    %151 = vmatpush2.msra.mxu0 0.0
    %152 = vmatprep.subr.mxu0 0.0
    %153 = vmatpush2.msra.mxu0 0.0
    %154 = vmatprep.subr.mxu0 0.0
    %155 = vmatpush2.msra.mxu0 0.0
    %156 = vmatprep.subr.mxu0 0.0
    %157 = vmatpush2.msra.mxu0 0.0
    %158 = vmatprep.subr.mxu0 0.0
    %159 = vmatpush2.msra.mxu0 0.0
    %160 = vmatprep.subr.mxu0 0.0
    %161 = vmatpush2.msra.mxu0 0.0
    %162 = vmatprep.mubr.f32.mxu0 0.0
    %163 = vmatmul.mubr.f32.gmra.mxu0 %v96
    %v164 = vpop.f32.mrf.mxu0
    %v165 = vadd.f32 %v93, %v164
    %v166 = vpop.f32.mrf.mxu0
    %167 = vdwg.mxu0
    %v168 = vmax.f32 %v165, 0.0
    %v169 = vld [vmem:[#allocation7 + $0x1] sm:$0x1]
    %v170 = vlaneseq
    %v171 = vshrl.u32 %v170, 7
    %v172 = vsub.s32 0, %v171
    %v173 = vrot.slane %v169, %v172
    %174 = vmatprep.subr.mxu0 0.0
    %175 = vmatpush1.msra.mxu0 %v72
    %176 = vmatprep.subr.mxu0 0.0
    %177 = vmatpush1.msra.mxu0 %v71
    %178 = vmatprep.subr.mxu0 0.0
    %179 = vmatpush1.msra.mxu0 %v70
    %180 = vmatprep.subr.mxu0 0.0
    %181 = vmatpush1.msra.mxu0 %v69
    %182 = vmatprep.subr.mxu0 0.0
    %183 = vmatpush1.msra.mxu0 %v68
    %184 = vmatprep.subr.mxu0 0.0
    %185 = vmatpush1.msra.mxu0 %v67
    %186 = vmatprep.subr.mxu0 0.0
    %187 = vmatpush1.msra.mxu0 %v66
    %188 = vmatprep.subr.mxu0 0.0
    %189 = vmatpush1.msra.mxu0 %v65
    %190 = vmatprep.subr.mxu0 0.0
    %191 = vmatpush1.msra.mxu0 %v64
    %192 = vmatprep.subr.mxu0 0.0
    %193 = vmatpush1.msra.mxu0 %v63
    %194 = vmatprep.subr.mxu0 0.0
    %195 = vmatpush1.msra.mxu0 %v62
    %196 = vmatprep.subr.mxu0 0.0
    %197 = vmatpush1.msra.mxu0 %v61
    %198 = vmatprep.subr.mxu0 0.0
    %199 = vmatpush1.msra.mxu0 %v60
    %200 = vmatprep.subr.mxu0 0.0
    %201 = vmatpush1.msra.mxu0 %v59
    %202 = vmatprep.subr.mxu0 0.0
    %203 = vmatpush1.msra.mxu0 %v58
    %204 = vmatprep.subr.mxu0 0.0
    %205 = vmatpush1.msra.mxu0 %v57
    %206 = vmatprep.subr.mxu0 0.0
    %207 = vmatpush2.msra.mxu0 0.0
    %208 = vmatprep.subr.mxu0 0.0
    %209 = vmatpush2.msra.mxu0 0.0
    %210 = vmatprep.subr.mxu0 0.0
    %211 = vmatpush2.msra.mxu0 0.0
    %212 = vmatprep.subr.mxu0 0.0
    %213 = vmatpush2.msra.mxu0 0.0
    %214 = vmatprep.subr.mxu0 0.0
    %215 = vmatpush2.msra.mxu0 0.0
    %216 = vmatprep.subr.mxu0 0.0
    %217 = vmatpush2.msra.mxu0 0.0
    %218 = vmatprep.subr.mxu0 0.0
    %219 = vmatpush2.msra.mxu0 0.0
    %220 = vmatprep.subr.mxu0 0.0
    %221 = vmatpush2.msra.mxu0 0.0
    %222 = vmatprep.subr.mxu0 0.0
    %223 = vmatpush2.msra.mxu0 0.0
    %224 = vmatprep.subr.mxu0 0.0
    %225 = vmatpush2.msra.mxu0 0.0
    %226 = vmatprep.subr.mxu0 0.0
    %227 = vmatpush2.msra.mxu0 0.0
    %228 = vmatprep.subr.mxu0 0.0
    %229 = vmatpush2.msra.mxu0 0.0
    %230 = vmatprep.subr.mxu0 0.0
    %231 = vmatpush2.msra.mxu0 0.0
    %232 = vmatprep.subr.mxu0 0.0
    %233 = vmatpush2.msra.mxu0 0.0
    %234 = vmatprep.subr.mxu0 0.0
    %235 = vmatpush2.msra.mxu0 0.0
    %236 = vmatprep.subr.mxu0 0.0
    %237 = vmatpush2.msra.mxu0 0.0
    %238 = vmatprep.mubr.f32.mxu0 0.0
    %239 = vmatmul.mubr.f32.gmra.mxu0 %v168
    %v240 = vpop.f32.mrf.mxu0
    %v241 = vadd.f32 %v173, %v240
    %v242 = vpop.f32.mrf.mxu0
    %243 = vdwg.mxu0
    %v244 = vmax.f32 %v241, 0.0
    %v245 = vld [vmem:[#allocation7 + $0x2] sm:$0x1]
    %v246 = vlaneseq
    %v247 = vshrl.u32 %v246, 7
    %v248 = vsub.s32 0, %v247
    %v249 = vrot.slane %v245, %v248
    %250 = vmatprep.subr.mxu0 0.0
    %251 = vmatpush1.msra.mxu0 %v88
    %252 = vmatprep.subr.mxu0 0.0
    %253 = vmatpush1.msra.mxu0 %v87
    %254 = vmatprep.subr.mxu0 0.0
    %255 = vmatpush1.msra.mxu0 %v86
    %256 = vmatprep.subr.mxu0 0.0
    %257 = vmatpush1.msra.mxu0 %v85
    %258 = vmatprep.subr.mxu0 0.0
    %259 = vmatpush1.msra.mxu0 %v84
    %260 = vmatprep.subr.mxu0 0.0
    %261 = vmatpush1.msra.mxu0 %v83
    %262 = vmatprep.subr.mxu0 0.0
    %263 = vmatpush1.msra.mxu0 %v82
    %264 = vmatprep.subr.mxu0 0.0
    %265 = vmatpush1.msra.mxu0 %v81
    %266 = vmatprep.subr.mxu0 0.0
    %267 = vmatpush1.msra.mxu0 %v80
    %268 = vmatprep.subr.mxu0 0.0
    %269 = vmatpush1.msra.mxu0 %v79
    %270 = vmatprep.subr.mxu0 0.0
    %271 = vmatpush1.msra.mxu0 %v78
    %272 = vmatprep.subr.mxu0 0.0
    %273 = vmatpush1.msra.mxu0 %v77
    %274 = vmatprep.subr.mxu0 0.0
    %275 = vmatpush1.msra.mxu0 %v76
    %276 = vmatprep.subr.mxu0 0.0
    %277 = vmatpush1.msra.mxu0 %v75
    %278 = vmatprep.subr.mxu0 0.0
    %279 = vmatpush1.msra.mxu0 %v74
    %280 = vmatprep.subr.mxu0 0.0
    %281 = vmatpush1.msra.mxu0 %v73
    %282 = vmatprep.subr.mxu0 0.0
    %283 = vmatpush2.msra.mxu0 0.0
    %284 = vmatprep.subr.mxu0 0.0
    %285 = vmatpush2.msra.mxu0 0.0
    %286 = vmatprep.subr.mxu0 0.0
    %287 = vmatpush2.msra.mxu0 0.0
    %288 = vmatprep.subr.mxu0 0.0
    %289 = vmatpush2.msra.mxu0 0.0
    %290 = vmatprep.subr.mxu0 0.0
    %291 = vmatpush2.msra.mxu0 0.0
    %292 = vmatprep.subr.mxu0 0.0
    %293 = vmatpush2.msra.mxu0 0.0
    %294 = vmatprep.subr.mxu0 0.0
    %295 = vmatpush2.msra.mxu0 0.0
    %296 = vmatprep.subr.mxu0 0.0
    %297 = vmatpush2.msra.mxu0 0.0
    %298 = vmatprep.subr.mxu0 0.0
    %299 = vmatpush2.msra.mxu0 0.0
    %300 = vmatprep.subr.mxu0 0.0
    %301 = vmatpush2.msra.mxu0 0.0
    %302 = vmatprep.subr.mxu0 0.0
    %303 = vmatpush2.msra.mxu0 0.0
    %304 = vmatprep.subr.mxu0 0.0
    %305 = vmatpush2.msra.mxu0 0.0
    %306 = vmatprep.subr.mxu0 0.0
    %307 = vmatpush2.msra.mxu0 0.0
    %308 = vmatprep.subr.mxu0 0.0
    %309 = vmatpush2.msra.mxu0 0.0
    %310 = vmatprep.subr.mxu0 0.0
    %311 = vmatpush2.msra.mxu0 0.0
    %312 = vmatprep.subr.mxu0 0.0
    %313 = vmatpush2.msra.mxu0 0.0
    %314 = vmatprep.mubr.f32.mxu0 0.0
    %315 = vmatmul.mubr.f32.gmra.mxu0 %v244
    %v316 = vpop.f32.mrf.mxu0
    %v317 = vadd.f32 %v249, %v316
    %v318 = vpop.f32.mrf.mxu0
    %319 = vdwg.mxu0
    %320 = vst [vmem:[#allocation8] sm:$0xff] %v317
    // Predicated region
    $region26: #{tpu_custom_call.1} parent=1 // pred_check
      _
    $region27: #{tpu_custom_call.1} parent=1 // pred_check_branch
      %322 = sbr.rel (0) target = $region29
    $region28: #{tpu_custom_call.1} parent=1 // pred_region
      %s324 = ssub.s32 128, 128
      %325 = vsyncadd [#allocation4], %s324
      %s327 = sshll.u32 [#allocation8], 4
      %s328 = int_to_ptr.vmem [resolvable:$true] %s327
      %330 = dma.vmem_to_hbm [thread:$0]  %s328, 128, %s3, [#allocation4]
    $region29: #{tpu_custom_call.1} parent=1 // pred_fallthru
      _
    // Predicated region
    $region30: #{tpu_custom_call.1} parent=1 // pred_check
      _
    $region31: #{tpu_custom_call.1} parent=1 // pred_check_branch
      %332 = sbr.rel (0) target = $region33
    $region32: #{tpu_custom_call.1} parent=1 // pred_region
      %333 = dma.done [#allocation4], 128
    $region33: #{tpu_custom_call.1} parent=1 // pred_fallthru
      _
    %334 = vsyncpa [#allocation3], 1
    %335 = vsyncpa [#allocation6], 1
    %336 = vsyncpa [#allocation4], 1

</llo_original>
